<compile_context>
chip_gen: v7x
topology: tpu7x:2x2x1
jax: 0.10.0
libtpu: 0.0.40
codegen_flags: <defaults>
</compile_context>

<pallas_src>
import functools

import jax
import jax.numpy as jnp
from jax.experimental import pallas as pl
from jax.experimental.pallas import tpu as pltpu

EPS = 1e-5  # PyTorch BatchNorm2d default


# ---------------------------------------------------------------------------
# small helpers
# ---------------------------------------------------------------------------
def _round_up(x, m):
    return -(-x // m) * m


def _pad_to(a, axis, size):
    pad = size - a.shape[axis]
    if pad <= 0:
        return a
    widths = [(0, 0)] * a.ndim
    widths[axis] = (0, pad)
    return jnp.pad(a, widths)


def _spatial_pad1(img_nhwc):
    # zero-pad H and W by 1 on each side (the conv's padding=1 halo)
    return jnp.pad(img_nhwc, ((0, 0), (1, 1), (1, 1), (0, 0)))


def _block_bytes(shape, dtype):
    n = 1
    for s in shape:
        n *= int(s)
    return n * jnp.dtype(dtype).itemsize


def _vmem_limit(block_bytes):
    # double-buffered DMA blocks + headroom for spills / epilogue temporaries
    return int(min(48 << 20, max(16 << 20, 2 * block_bytes + (8 << 20))))


def _pick_row_tile(ho, wo, coutp):
    """Pick a row tile TH that divides Ho.  TH*Wo is bounded so the f32
    accumulator stays small; prefer >=2 tiles so the parallel grid axis can
    feed both TensorCores (v7x / megacore)."""
    if wo % 8 != 0:
        return 1, ho                       # keep in-kernel reshapes sublane-aligned
    budget = max(8, 65536 // max(coutp, 128))   # ~256 KiB f32 accumulator
    divs = [d for d in range(1, ho + 1) if ho % d == 0 and d * wo <= budget]
    if not divs:
        return 1, ho
    th = max(divs)
    if ho // th < 2:
        two = [d for d in divs if ho // d >= 2]
        if two:
            th = max(two)
    return th, ho // th


def _pick_patch_tile(p_rows, budget=512):
    n = max(2, -(-p_rows // budget))
    tp = _round_up(-(-p_rows // n), 16)
    return tp, -(-p_rows // tp)


# ---------------------------------------------------------------------------
# Pallas kernel: stride-1 3x3 conv from a resident halo image
#                + folded-BN bias [+ residual | + fused 1x1 downsample] [+ReLU]
# ---------------------------------------------------------------------------
def _halo_conv_kernel(*refs, th, wo, apply_relu, residual_mode):
    # residual_mode: 0 = none, 1 = residual tile added in f32,
    #                2 = residual computed in-kernel (1x1 conv + folded BN)
    if residual_mode == 0:
        x_ref, w_ref, b_ref, o_ref = refs
    elif residual_mode == 1:
        x_ref, w_ref, b_ref, r_ref, o_ref = refs
    else:
        x_ref, w_ref, b_ref, xs_ref, wd_ref, bd_ref, o_ref = refs

    cin = x_ref.shape[-1]
    coutp = o_ref.shape[-1]
    r0 = pl.program_id(1) * th          # first output row of this tile

    acc = jnp.zeros((th * wo, coutp), jnp.float32)
    for kh in range(3):
        for kw in range(3):
            # unit-stride slice of the resident padded image: rows r0+kh ..,
            # cols kw .. kw+wo-1 — no HBM im2col traffic.
            tap = x_ref[0, pl.ds(r0 + kh, th), pl.ds(kw, wo), :]
            acc += jnp.dot(tap.reshape(th * wo, cin), w_ref[kh * 3 + kw],
                           preferred_element_type=jnp.float32)
    acc += b_ref[...]                   # folded BN bias (f32)
    if residual_mode == 1:
        acc += r_ref[0].reshape(th * wo, coutp).astype(jnp.float32)
    elif residual_mode == 2:
        xs = xs_ref[0].reshape(th * wo, xs_ref.shape[-1])
        acc += jnp.dot(xs, wd_ref[...], preferred_element_type=jnp.float32)
        acc += bd_ref[...]
    if apply_relu:
        acc = jnp.maximum(acc, 0.0)
    o_ref[0] = acc.reshape(th, wo, coutp).astype(o_ref.dtype)


def conv3x3_s1(x_img, w_taps, bias, *, residual=None, xs=None, wd=None, bd=None,
               apply_relu=True, out_dtype):
    """Stride-1, padding-1 3x3 conv with eval-mode BN folded into (w_taps, bias).

    x_img : [N, Ho+2, Wo+2, Cin]   spatially pre-padded NHWC image
    w_taps: [9, Cin, Coutp]        tap-major weights (BN scale folded in)
    bias  : [1, Coutp]             folded BN bias, f32
    residual: [N, Ho, Wo, Coutp]   identity skip, added in f32
    xs/wd/bd: fused 1x1-downsample residual branch.
    Returns [N, Ho, Wo, Coutp] in out_dtype.
    """
    n, hp, wp, cin = x_img.shape
    ho, wo = hp - 2, wp - 2
    coutp = w_taps.shape[-1]
    th, n_h = _pick_row_tile(ho, wo, coutp)

    in_specs = [
        # whole padded image per batch element; stays resident across row tiles
        pl.BlockSpec((1, hp, wp, cin), lambda b, h: (b, 0, 0, 0)),
        # weights / bias: full-extent, DMA'd once per pallas_call
        pl.BlockSpec((9, cin, coutp), lambda b, h: (0, 0, 0)),
        pl.BlockSpec((1, coutp), lambda b, h: (0, 0)),
    ]
    args = [x_img, w_taps, bias]
    blocks = [((1, hp, wp, cin), x_img.dtype),
              ((9, cin, coutp), w_taps.dtype),
              ((1, coutp), bias.dtype)]

    if residual is not None:
        residual_mode = 1
        in_specs.append(pl.BlockSpec((1, th, wo, coutp), lambda b, h: (b, h, 0, 0)))
        args.append(residual)
        blocks.append(((1, th, wo, coutp), residual.dtype))
    elif xs is not None:
        residual_mode = 2
        cd = xs.shape[-1]
        in_specs += [
            pl.BlockSpec((1, th, wo, cd), lambda b, h: (b, h, 0, 0)),
            pl.BlockSpec((cd, coutp), lambda b, h: (0, 0)),
            pl.BlockSpec((1, coutp), lambda b, h: (0, 0)),
        ]
        args += [xs, wd, bd]
        blocks += [((1, th, wo, cd), xs.dtype), ((cd, coutp), wd.dtype),
                   ((1, coutp), bd.dtype)]
    else:
        residual_mode = 0

    blocks.append(((1, th, wo, coutp), out_dtype))
    blk_bytes = sum(_block_bytes(s, d) for s, d in blocks)

    kernel = functools.partial(_halo_conv_kernel, th=th, wo=wo,
                               apply_relu=apply_relu, residual_mode=residual_mode)
    return pl.pallas_call(
        kernel,
        out_shape=jax.ShapeDtypeStruct((n, ho, wo, coutp), out_dtype),
        grid=(n, n_h),
        in_specs=in_specs,
        out_specs=pl.BlockSpec((1, th, wo, coutp), lambda b, h: (b, h, 0, 0)),
        compiler_params=pltpu.CompilerParams(
            dimension_semantics=("parallel", "parallel"),
            vmem_limit_bytes=_vmem_limit(blk_bytes),
        ),
    )(*args)


# ---------------------------------------------------------------------------
# Pallas kernel: patch-matmul fallback for the stride-2 conv1
# ---------------------------------------------------------------------------
def _patch_matmul_kernel(p_ref, w_ref, b_ref, o_ref, *, apply_relu):
    acc = jnp.dot(p_ref[0], w_ref[...], preferred_element_type=jnp.float32)
    acc += b_ref[...]
    if apply_relu:
        acc = jnp.maximum(acc, 0.0)
    o_ref[0] = acc.astype(o_ref.dtype)


def conv3x3_strided_patches(patches, w_mat, bias, *, apply_relu=True, out_dtype):
    """[N, P, 9*Cin] @ [9*Cin, Coutp] + bias (+ relu).  Weight / bias are
    full-extent resident; grid = (N, row tiles)."""
    n, p_rows, k = patches.shape
    coutp = w_mat.shape[-1]
    tp, n_p = _pick_patch_tile(p_rows)
    patches = _pad_to(patches, 1, tp * n_p)

    blk_bytes = (_block_bytes((1, tp, k), patches.dtype)
                 + _block_bytes((k, coutp), w_mat.dtype)
                 + _block_bytes((1, coutp), bias.dtype)
                 + _block_bytes((1, tp, coutp), out_dtype))
    out = pl.pallas_call(
        functools.partial(_patch_matmul_kernel, apply_relu=apply_relu),
        out_shape=jax.ShapeDtypeStruct((n, tp * n_p, coutp), out_dtype),
        grid=(n, n_p),
        in_specs=[
            pl.BlockSpec((1, tp, k), lambda b, t: (b, t, 0)),
            pl.BlockSpec((k, coutp), lambda b, t: (0, 0)),
            pl.BlockSpec((1, coutp), lambda b, t: (0, 0)),
        ],
        out_specs=pl.BlockSpec((1, tp, coutp), lambda b, t: (b, t, 0)),
        compiler_params=pltpu.CompilerParams(
            dimension_semantics=("parallel", "parallel"),
            vmem_limit_bytes=_vmem_limit(blk_bytes),
        ),
    )(patches, w_mat, bias)
    return out[:, :p_rows]


# ---------------------------------------------------------------------------
# plain-JAX glue: weight / BN repacking, im2col (stride>1 only)
# ---------------------------------------------------------------------------
def im2col_3x3(x_nhwc, stride):
    """Only used for stride>1 conv1.  patches [N, Ho*Wo, 9*C].
    TODO(synk): form stride-2 taps in-kernel (polyphase / strided pl.ds) so
    the downsampling conv1 also avoids HBM patch traffic."""
    n, h, w, c = x_nhwc.shape
    xp = jnp.pad(x_nhwc, ((0, 0), (1, 1), (1, 1), (0, 0)))
    ho = (h - 1) // stride + 1
    wo = (w - 1) // stride + 1
    cols = []
    for kh in range(3):
        for kw in range(3):
            sl = xp[:, kh:kh + (ho - 1) * stride + 1:stride,
                       kw:kw + (wo - 1) * stride + 1:stride, :]
            cols.append(sl.reshape(n, ho * wo, c))
    return jnp.concatenate(cols, axis=-1), ho, wo


def _w3x3_mat(w_oihw):
    # [O, I, 3, 3] -> [9*I, O], tap-major (matches im2col column order)
    o, i, kh, kw = w_oihw.shape
    return jnp.transpose(w_oihw, (2, 3, 1, 0)).reshape(kh * kw * i, o)


def _w3x3_taps(w_oihw, cinp, coutp):
    # [O, I, 3, 3] -> [9, cinp, coutp], tap-major; padded rows/cols are zero
    o, i, kh, kw = w_oihw.shape
    w = jnp.transpose(w_oihw, (2, 3, 1, 0)).reshape(kh * kw, i, o)
    return _pad_to(_pad_to(w, 1, cinp), 2, coutp)


def _fold_bn(g, b, m, v):
    s = g / jnp.sqrt(v + EPS)
    return s, b - m * s


def resblock_pallas(x_nchw, p, stride, compute_dtype=jnp.bfloat16, out_dtype=None):
    """ResBlock forward (eval-mode BatchNorm folded into the conv weights)."""
    x = jnp.transpose(x_nchw, (0, 2, 3, 1))               # NCHW -> NHWC
    n, h, w, cin = x.shape
    cout = p["w1"].shape[0]
    # bf16 is recommended for out_dtype when stacking blocks; default matches x.
    out_dtype = out_dtype or x.dtype
    ho = (h - 1) // stride + 1
    wo = (w - 1) // stride + 1
    coutp = _round_up(cout, 128)       # lane-dense output stores; padding kept
                                       # through the whole block (zeros)

    s1, b1 = _fold_bn(p["g1"], p["b1"], p["m1"], p["v1"])
    s2, b2 = _fold_bn(p["g2"], p["b2"], p["m2"], p["v2"])
    b1p = _pad_to(b1.reshape(1, cout), 1, coutp).astype(jnp.float32)
    b2p = _pad_to(b2.reshape(1, cout), 1, coutp).astype(jnp.float32)

    # ---- conv1 (3x3, stride) + bn1 + relu --------------------------------
    if stride == 1:
        w1t = _w3x3_taps(p["w1"] * s1[:, None, None, None], cin, coutp)
        x_img = _spatial_pad1(x.astype(compute_dtype))
        out1 = conv3x3_s1(x_img, w1t.astype(compute_dtype), b1p,
                          apply_relu=True, out_dtype=compute_dtype)
    else:
        patches, _, _ = im2col_3x3(x.astype(compute_dtype), stride)
        w1m = _pad_to(_w3x3_mat(p["w1"]) * s1[None, :], 1, coutp)
        out1 = conv3x3_strided_patches(
            patches, w1m.astype(compute_dtype), b1p,
            apply_relu=True, out_dtype=compute_dtype)
        out1 = out1.reshape(n, ho, wo, coutp)
    # out1 keeps the padded Cout channels (exactly zero); conv2's weight rows
    # for those padded input channels are zero as well.

    # ---- conv2 (3x3, stride 1) + bn2 + residual + relu, fully fused ------
    w2t = _w3x3_taps(p["w2"] * s2[:, None, None, None], coutp, coutp)
    out1_img = _spatial_pad1(out1)
    if stride != 1 or cin != cout:
        sd, bd = _fold_bn(p["gd"], p["bd"], p["md"], p["vd"])
        wd = _pad_to(p["wd"].reshape(cout, cin).T * sd[None, :], 1, coutp)
        bdp = _pad_to(bd.reshape(1, cout), 1, coutp).astype(jnp.float32)
        xs = x[:, ::stride, ::stride, :].astype(compute_dtype)   # [N,Ho,Wo,Cin]
        out2 = conv3x3_s1(out1_img, w2t.astype(compute_dtype), b2p,
                          xs=xs, wd=wd.astype(compute_dtype), bd=bdp,
                          apply_relu=True, out_dtype=out_dtype)
    else:
        # identity skip kept in its original (f32) dtype; added in f32 acc
        resid = _pad_to(x, 3, coutp)
        out2 = conv3x3_s1(out1_img, w2t.astype(compute_dtype), b2p,
                          residual=resid, apply_relu=True, out_dtype=out_dtype)

    return jnp.transpose(out2[..., :cout], (0, 3, 1, 2))         # -> NCHW


# ---------------------------------------------------------------------------
# pure-JAX reference (mirrors the PyTorch forward in eval mode)
# ---------------------------------------------------------------------------
def resblock_ref(x, p, stride):
    def conv(x, w, s, pad):
        return jax.lax.conv_general_dilated(
            x, w, (s, s), [(pad, pad), (pad, pad)],
            dimension_numbers=("NCHW", "OIHW", "NCHW"),
        )

    def bn(x, g, b, m, v):
        rs = lambda a: a[None, :, None, None]
        return (x - rs(m)) / jnp.sqrt(rs(v) + EPS) * rs(g) + rs(b)

    out = jax.nn.relu(bn(conv(x, p["w1"], stride, 1), p["g1"], p["b1"], p["m1"], p["v1"]))
    out = bn(conv(out, p["w2"], 1, 1), p["g2"], p["b2"], p["m2"], p["v2"])
    if stride != 1 or p["w1"].shape[1] != p["w1"].shape[0]:
        ident = bn(conv(x, p["wd"], stride, 0), p["gd"], p["bd"], p["md"], p["vd"])
    else:
        ident = x
    return jax.nn.relu(out + ident)


# ---------------------------------------------------------------------------
if __name__ == "__main__":
    key = jax.random.PRNGKey(0)

    def make_params(k, cin, cout):
        ks = jax.random.split(k, 6)

        def bn_params(kk, c):
            k0, k1, k2, k3 = jax.random.split(kk, 4)
            return (1.0 + 0.1 * jax.random.normal(k0, (c,), jnp.float32),
                    0.1 * jax.random.normal(k1, (c,), jnp.float32),
                    0.1 * jax.random.normal(k2, (c,), jnp.float32),
                    1.0 + 0.1 * jnp.abs(jax.random.normal(k3, (c,), jnp.float32)))

        g1, b1, m1, v1 = bn_params(ks[3], cout)
        g2, b2, m2, v2 = bn_params(ks[4], cout)
        gd, bd, md, vd = bn_params(ks[5], cout)
        return dict(
            w1=0.1 * jax.random.normal(ks[0], (cout, cin, 3, 3), jnp.float32),
            w2=0.1 * jax.random.normal(ks[1], (cout, cout, 3, 3), jnp.float32),
            wd=0.1 * jax.random.normal(ks[2], (cout, cin, 1, 1), jnp.float32),
            g1=g1, b1=b1, m1=m1, v1=v1,
            g2=g2, b2=b2, m2=m2, v2=v2,
            gd=gd, bd=bd, md=md, vd=vd,
        )

    kA, kB, kx1, kx2 = jax.random.split(key, 4)

    # Config A: stride=2, Cin!=Cout -> fused 1x1 downsample residual branch,
    #           conv1 on the strided-patch path, conv2 on the halo path.
    N, Cin, Cout, H, W, stride = 2, 4, 8, 16, 16, 2
    pA = make_params(kA, Cin, Cout)
    xA = jax.random.normal(kx1, (N, Cin, H, W), jnp.float32)
    refA = jax.block_until_ready(resblock_ref(xA, pA, stride))

    outA_f32 = jax.block_until_ready(
        resblock_pallas(xA, pA, stride, compute_dtype=jnp.float32))
    assert outA_f32.shape == refA.shape == (N, Cout, H // stride, W // stride)
    assert jnp.allclose(outA_f32, refA, atol=5e-4, rtol=5e-4), float(
        jnp.max(jnp.abs(outA_f32 - refA)))

    outA_bf16 = jax.block_until_ready(
        resblock_pallas(xA, pA, stride, compute_dtype=jnp.bfloat16))
    assert jnp.allclose(outA_bf16, refA, atol=1e-1, rtol=1e-1), float(
        jnp.max(jnp.abs(outA_bf16 - refA)))

    # Config B: stride=1, Cin==Cout -> identity residual, both convs on the
    #           halo (no-im2col) path.
    pB = make_params(kB, Cout, Cout)
    xB = jax.random.normal(kx2, (N, Cout, H, W), jnp.float32)
    refB = jax.block_until_ready(resblock_ref(xB, pB, 1))
    outB_f32 = jax.block_until_ready(
        resblock_pallas(xB, pB, 1, compute_dtype=jnp.float32))
    assert outB_f32.shape == refB.shape == (N, Cout, H, W)
    assert jnp.allclose(outB_f32, refB, atol=5e-4, rtol=5e-4), float(
        jnp.max(jnp.abs(outB_f32 - refB)))

    outB_bf16 = jax.block_until_ready(
        resblock_pallas(xB, pB, 1, compute_dtype=jnp.bfloat16))
    assert jnp.allclose(outB_bf16, refB, atol=1e-1, rtol=1e-1), float(
        jnp.max(jnp.abs(outB_bf16 - refB)))

    print("KERNEL_OK")
</pallas_src>

<mosaic_0001>
module attributes {stable_mosaic.version = 11 : i64} {
  func.func @_patch_matmul_kernel(%arg0: i32, %arg1: i32, %arg2: memref<1x32x36xf32, #tpu.memory_space<vmem>>, %arg3: memref<36x128xf32, #tpu.memory_space<vmem>>, %arg4: memref<1x128xf32, #tpu.memory_space<vmem>>, %arg5: memref<1x32x128xf32, #tpu.memory_space<vmem>>) attributes {dimension_semantics = [#tpu.dimension_semantics<parallel>, #tpu.dimension_semantics<parallel>], iteration_bounds = array<i64: 2, 2>, scalar_prefetch = 0 : i64, scratch_operands = 0 : i64, tpu.core_type = #tpu.core_type<tc>, window_params = [{transform_indices = @transform_0, window_bounds = array<i64: 1, 32, 36>}, {pipeline_mode = #tpu.pipeline_mode<synchronous>, transform_indices = @transform_1, window_bounds = array<i64: 36, 128>}, {pipeline_mode = #tpu.pipeline_mode<synchronous>, transform_indices = @transform_2, window_bounds = array<i64: 1, 128>}, {transform_indices = @transform_3, window_bounds = array<i64: 1, 32, 128>}]} {
    %c0 = arith.constant 0 : index
    %c0_0 = arith.constant 0 : index
    %c0_1 = arith.constant 0 : index
    %0 = vector.load %arg2[%c0, %c0_0, %c0_1] : memref<1x32x36xf32, #tpu.memory_space<vmem>>, vector<1x32x36xf32>
    %1 = vector.shape_cast %0 : vector<1x32x36xf32> to vector<32x36xf32>
    %c0_2 = arith.constant 0 : index
    %c0_3 = arith.constant 0 : index
    %2 = vector.load %arg3[%c0_2, %c0_3] : memref<36x128xf32, #tpu.memory_space<vmem>>, vector<36x128xf32>
    %cst = arith.constant dense<0.000000e+00> : vector<32x128xf32>
    %3 = tpu.matmul %1, %2, %cst {dimension_numbers = #tpu.dot_dimension_numbers<[1], [0], [0], [1], [0, 0, 1, 1], [], []>} : vector<32x36xf32>, vector<36x128xf32>, vector<32x128xf32> -> vector<32x128xf32>
    %c0_4 = arith.constant 0 : index
    %c0_5 = arith.constant 0 : index
    %4 = vector.load %arg4[%c0_4, %c0_5] : memref<1x128xf32, #tpu.memory_space<vmem>>, vector<1x128xf32>
    %5 = vector.broadcast %4 : vector<1x128xf32> to vector<32x128xf32>
    %6 = arith.addf %3, %5 : vector<32x128xf32>
    %cst_6 = arith.constant 0.000000e+00 : f32
    %7 = vector.broadcast %cst_6 : f32 to vector<32x128xf32>
    %8 = arith.maximumf %6, %7 : vector<32x128xf32>
    %c0_7 = arith.constant 0 : index
    %c0_8 = arith.constant 0 : index
    %c0_9 = arith.constant 0 : index
    %9 = vector.load %arg5[%c0_7, %c0_8, %c0_9] : memref<1x32x128xf32, #tpu.memory_space<vmem>>, vector<1x32x128xf32>
    %10 = vector.shape_cast %9 : vector<1x32x128xf32> to vector<32x128xf32>
    %11 = vector.shape_cast %8 : vector<32x128xf32> to vector<1x32x128xf32>
    tpu.vector_store %arg5[%c0_7, %c0_8, %c0_9], %11 {strides = array<i32>} : memref<1x32x128xf32, #tpu.memory_space<vmem>>, vector<1x32x128xf32>,
    return
  }
  func.func @transform_0(%arg0: i32, %arg1: i32) -> (i32, i32, i32) {
    %c0_i32 = arith.constant 0 : i32
    %c0_i32_0 = arith.constant 0 : i32
    return %arg0, %arg1, %c0_i32 : i32, i32, i32
  }
  func.func @transform_1(%arg0: i32, %arg1: i32) -> (i32, i32) {
    %c0_i32 = arith.constant 0 : i32
    %c0_i32_0 = arith.constant 0 : i32
    %c0_i32_1 = arith.constant 0 : i32
    return %c0_i32, %c0_i32_0 : i32, i32
  }
  func.func @transform_2(%arg0: i32, %arg1: i32) -> (i32, i32) {
    %c0_i32 = arith.constant 0 : i32
    %c0_i32_0 = arith.constant 0 : i32
    %c0_i32_1 = arith.constant 0 : i32
    return %c0_i32, %c0_i32_0 : i32, i32
  }
  func.func @transform_3(%arg0: i32, %arg1: i32) -> (i32, i32, i32) {
    %c0_i32 = arith.constant 0 : i32
    %c0_i32_0 = arith.constant 0 : i32
    return %arg0, %arg1, %c0_i32 : i32, i32, i32
  }
}

</mosaic_0001>

<llo_original>
// kernel: tpu_custom_call.1
$region0: #{tpu_custom_call.1}
  #allocation0 [shape = 'u32[]', space=smem, size = 0x4, offset = 0x4, fixed_abs, tag = 'smem constant byte address 0x4 - core index']
  #allocation1 [shape = 'u32[144,128]{1,0:T(1,128)}', space=vmem, size = 0x12000, scoped, tag = 'internal scratch']
  %s0 = inlined_call_operand.vmem [shape: f32[2,64,36], index: 0, kind: input, shape index: {}]
  %s1 = inlined_call_operand.vmem [shape: f32[36,128], index: 1, kind: input, shape index: {}]
  %s2 = inlined_call_operand.vmem [shape: f32[1,128], index: 2, kind: input, shape index: {}]
  %s3 = inlined_call_operand.hbm [shape: f32[2,64,128], index: 3, kind: output, shape index: {}]
  %s4 = sld [smem:[#allocation0]]
  $region45: #{tpu_custom_call.1} parent=0
    _
  %s6 = ssub.s32 1, %s4
  %s7 = scalar_select 0, %s6, %s4
  $region1: #{tpu_custom_call.1} parent=0
    #allocation2 [shape = 'u8[32768]{0}', space=vmem, size = 0x8000, scoped, tag = 'output window, operand 0']
    #allocation3 [shape = 's32[2]{0}', space=sflag, size = 0x8, scoped, tag = 'scoped memory for tpu_custom_call.1']
    %8 = vsyncpa [#allocation3], 0
    %s9 = scalar_lea.sflag [#allocation3], 1
    %10 = vsyncpa %s9, 0
    loop: start=0, step=1, limit=6
    $region2: #{tpu_custom_call.1} parent=1 // loop_pre_header
      _
    $region3: #{tpu_custom_call.1} parent=1 // loop_header
      %s12 = sphi 0, %s16
      %p13 = scmp.ge.s32.totalorder %s12, 6
      %s19 = sphi 0, %s31
      %s20 = sphi 0, %s27
      %s21 = sphi 0, %s19
      %s22 = sphi 0, %s20
      %s23 = sphi 0, %s21
      %s24 = sphi 0, %s22
      %s36 = sphi 0, %s38
      %s39 = sphi 0, %s36
      %s40 = sphi 0, %s39
      %s56 = sphi 0, %s40
      %s60 = sphi 0, %s60
      %s62 = sphi 0, %s60
      %s63 = sphi 0, %s62
      %s77 = sphi 0, %s63
      %s81 = sphi 0, %s81
      %s83 = sphi 0, %s81
      %s84 = sphi 0, %s83
      %s98 = sphi 0, %s84
      %s106 = sphi 0, %s108
      %s109 = sphi 0, %s106
      %s110 = sphi 0, %s109
      %s126 = sphi 0, %s110
    $region4: #{tpu_custom_call.1} parent=1 // loop_header_branch
      %15 = sbr.rel (%p13) target = $region8
    $region5: #{tpu_custom_call.1} parent=1 // loop_body
      %s17 = ssub.s32 %s12, 1
      %s18 = ssub.s32 %s12, 2
      %s25 = sadd.s32 1, %s20
      %p26 = scmp.ge.s32.totalorder %s25, 2
      %s27 = scalar_select %p26, 0, %s25
      %s28 = sadd.s32 1, %s19
      %s29 = scalar_select %p26, %s28, %s19
      %p30 = scmp.ge.s32.totalorder %s29, 2
      %s31 = scalar_select %p30, 0, %s29
      %s32 = ssub.s32 %s19, %s31
      %s33 = ssub.s32 %s20, %s27
      %s34 = sor.u32 %s32, %s33
      %p35 = scmp.eq.s32.totalorder %s34, 0
      %s37 = sadd.s32 %s36, 1
      %s38 = scalar_select %p35, %s36, %s37
      %p41 = pneg %p35
      %p42 = scmp.eq.s32.totalorder %s12, 3
      %p43 = por %p41, %p42
      %p44 = scmp.ne.s32.totalorder %s36, %s39
      %p45 = scmp.eq.s32.totalorder %s12, 0
      %p46 = por %p44, %p45
      %p47 = scmp.ne.s32.totalorder %s36, %s39
      %p48 = scmp.eq.s32.totalorder %s17, 3
      %p49 = por %p47, %p48
      %p50 = scmp.ne.s32.totalorder %s39, %s40
      %p51 = scmp.eq.s32.totalorder %s17, 0
      %p52 = por %p50, %p51
      %p53 = scmp.ne.s32.totalorder %s39, %s40
      %p54 = scmp.eq.s32.totalorder %s18, 3
      %p55 = por %p53, %p54
      %p57 = scmp.ne.s32.totalorder %s40, %s56
      %p58 = scmp.eq.s32.totalorder %s18, 0
      %p59 = por %p57, %p58
      %s61 = sadd.s32 %s60, 1
      %p64 = scmp.eq.s32.totalorder %s12, 3
      %p65 = scmp.ne.s32.totalorder %s60, %s62
      %p66 = scmp.eq.s32.totalorder %s12, 0
      %p67 = por %p65, %p66
      %p68 = scmp.ne.s32.totalorder %s60, %s62
      %p69 = scmp.eq.s32.totalorder %s17, 3
      %p70 = por %p68, %p69
      %p71 = scmp.ne.s32.totalorder %s62, %s63
      %p72 = scmp.eq.s32.totalorder %s17, 0
      %p73 = por %p71, %p72
      %p74 = scmp.ne.s32.totalorder %s62, %s63
      %p75 = scmp.eq.s32.totalorder %s18, 3
      %p76 = por %p74, %p75
      %p78 = scmp.ne.s32.totalorder %s63, %s77
      %p79 = scmp.eq.s32.totalorder %s18, 0
      %p80 = por %p78, %p79
      %s82 = sadd.s32 %s81, 1
      %p85 = scmp.eq.s32.totalorder %s12, 3
      %p86 = scmp.ne.s32.totalorder %s81, %s83
      %p87 = scmp.eq.s32.totalorder %s12, 0
      %p88 = por %p86, %p87
      %p89 = scmp.ne.s32.totalorder %s81, %s83
      %p90 = scmp.eq.s32.totalorder %s17, 3
      %p91 = por %p89, %p90
      %p92 = scmp.ne.s32.totalorder %s83, %s84
      %p93 = scmp.eq.s32.totalorder %s17, 0
      %p94 = por %p92, %p93
      %p95 = scmp.ne.s32.totalorder %s83, %s84
      %p96 = scmp.eq.s32.totalorder %s18, 3
      %p97 = por %p95, %p96
      %p99 = scmp.ne.s32.totalorder %s84, %s98
      %p100 = scmp.eq.s32.totalorder %s18, 0
      %p101 = por %p99, %p100
      %s102 = ssub.s32 %s19, %s31
      %s103 = ssub.s32 %s20, %s27
      %s104 = sor.u32 %s102, %s103
      %p105 = scmp.eq.s32.totalorder %s104, 0
      %s107 = sadd.s32 %s106, 1
      %s108 = scalar_select %p105, %s106, %s107
      %p111 = pneg %p105
      %p112 = scmp.eq.s32.totalorder %s12, 3
      %p113 = por %p111, %p112
      %p114 = scmp.ne.s32.totalorder %s106, %s109
      %p115 = scmp.eq.s32.totalorder %s12, 0
      %p116 = por %p114, %p115
      %p117 = scmp.ne.s32.totalorder %s106, %s109
      %p118 = scmp.eq.s32.totalorder %s17, 3
      %p119 = por %p117, %p118
      %p120 = scmp.ne.s32.totalorder %s109, %s110
      %p121 = scmp.eq.s32.totalorder %s17, 0
      %p122 = por %p120, %p121
      %p123 = scmp.ne.s32.totalorder %s109, %s110
      %p124 = scmp.eq.s32.totalorder %s18, 3
      %p125 = por %p123, %p124
      %p127 = scmp.ne.s32.totalorder %s110, %s126
      %p128 = scmp.eq.s32.totalorder %s18, 0
      %p129 = por %p127, %p128
      %p130 = scmp.le.s32.totalorder 1, %s12
      %p131 = scmp.lt.s32.totalorder %s12, 5
      %p132 = pnand %p130, %p131
      %p133 = pneg %p132
      // Predicated region
      $region9: #{tpu_custom_call.1} parent=5 // pred_check
        _
      $region10: #{tpu_custom_call.1} parent=5 // pred_check_branch
        %135 = sbr.rel (%p132) target = $region12
      $region11: #{tpu_custom_call.1} parent=5 // pred_region
        %s136 = ssub.s32 %s12, 1
        // Predicated region
        $region13: #{tpu_custom_call.1} parent=11 // pred_check
          %p137 = pneg %p73
        $region14: #{tpu_custom_call.1} parent=11 // pred_check_branch
          %139 = sbr.rel (%p137) target = $region16
        $region15: #{tpu_custom_call.1} parent=11 // pred_region
          _
        $region16: #{tpu_custom_call.1} parent=11 // pred_fallthru
          _
        // Predicated region
        $region17: #{tpu_custom_call.1} parent=11 // pred_check
          %p140 = pneg %p94
        $region18: #{tpu_custom_call.1} parent=11 // pred_check_branch
          %142 = sbr.rel (%p140) target = $region20
        $region19: #{tpu_custom_call.1} parent=11 // pred_region
          _
        $region20: #{tpu_custom_call.1} parent=11 // pred_fallthru
          _
      $region12: #{tpu_custom_call.1} parent=5 // pred_fallthru
        _
      %p143 = scmp.lt.s32.totalorder %s12, 4
      // Predicated region
      $region21: #{tpu_custom_call.1} parent=5 // pred_check
        %p144 = pneg %p143
      $region22: #{tpu_custom_call.1} parent=5 // pred_check_branch
        %146 = sbr.rel (%p144) target = $region24
      $region23: #{tpu_custom_call.1} parent=5 // pred_region
        // Predicated region
        $region25: #{tpu_custom_call.1} parent=23 // pred_check
          %p147 = pneg %p46
        $region26: #{tpu_custom_call.1} parent=23 // pred_check_branch
          %149 = sbr.rel (%p147) target = $region28
        $region27: #{tpu_custom_call.1} parent=23 // pred_region
          %s150 = smul.u32 4, %s20
          %p151 = scmp.lt.s32.totalorder %s19, 1
          %s152 = scalar_select %p151, %s19, 1
          %p153 = scmp.lt.s32.totalorder %s150, 7
          %s154 = scalar_select %p153, %s150, 7
          %s155 = smul.addr %s152, 8
          %s156 = sadd.s32 %s154, %s155
          %s157 = smul.addr %s156, 8
          %s158 = scalar_lea.vmem %s0, %s157
          %s159 = smul.u32 4, %s20
        $region28: #{tpu_custom_call.1} parent=23 // pred_fallthru
          _
      $region24: #{tpu_custom_call.1} parent=5 // pred_fallthru
        _
      %p160 = scmp.le.s32.totalorder 1, %s12
      %p161 = scmp.lt.s32.totalorder %s12, 5
      %p162 = pnand %p160, %p161
      %p163 = pneg %p162
      // Predicated region
      $region29: #{tpu_custom_call.1} parent=5 // pred_check
        _
      $region30: #{tpu_custom_call.1} parent=5 // pred_check_branch
        %165 = sbr.rel (%p162) target = $region32
      $region31: #{tpu_custom_call.1} parent=5 // pred_region
        %s166 = ssub.s32 %s12, 1
        %s167 = smul.u32 4, %s22
        %p168 = scmp.lt.s32.totalorder %s21, 1
        %s169 = scalar_select %p168, %s21, 1
        %p170 = scmp.lt.s32.totalorder %s167, 7
        %s171 = scalar_select %p170, %s167, 7
        %s172 = smul.addr %s169, 8
        %s173 = sadd.s32 %s171, %s172
        %s174 = smul.addr %s173, 8
        %s175 = scalar_lea.vmem %s0, %s174
        %p176 = pneg %p52
        %p177 = pneg %p49
        %p178 = pneg %p73
        %p179 = pneg %p70
        %p180 = pneg %p94
        %p181 = pneg %p91
        %p182 = pneg %p122
        %p183 = pneg %p119
        %s184 = sand.u32 %s109, 1
        %s185 = scalar_lea.sflag [#allocation3], %s184
        %s186 = sand.u32 %s109, 1
        %s187 = smul.addr %s186, 32
        %s188 = scalar_lea.vmem [#allocation2], %s187
        %s189 = smul.u32 4, %s22
        %p190 = scmp.lt.s32.totalorder %s21, 1
        %s191 = scalar_select %p190, %s21, 1
        %p192 = scmp.lt.s32.totalorder %s189, 7
        %s193 = scalar_select %p192, %s189, 7
        %s194 = smul.addr %s191, 8
        %s195 = sadd.s32 %s193, %s194
        %s196 = smul.addr %s195, 8
        %s197 = scalar_lea.vmem %s0, %s196
        %s198 = smul.u32 4, %s22
        %s199 = smul.u32 4, %s22
        %v200 = vld [vmem:[%s197] sm:$0xff]
        %v201 = vld [vmem:[%s197 + $0x8] sm:$0xff]
        %v202 = vld [vmem:[%s197 + $0x10] sm:$0xff]
        %v203 = vld [vmem:[%s197 + $0x18] sm:$0xff]
        %v204 = vld [vmem:[%s1] sm:$0xff]
        %v205 = vld [vmem:[%s1 + $0x8] sm:$0xff]
        %v206 = vld [vmem:[%s1 + $0x10] sm:$0xff]
        %v207 = vld [vmem:[%s1 + $0x18] sm:$0xff]
        %v208 = vld [vmem:[%s1 + $0x20] sm:$0xf]
        %v209 = vld [vmem:[%s2] sm:$0x1]
        %v211 = vlaneseq
        %v212 = vshrl.u32 %v211, 7
        %v213 = vsub.s32 0, %v212
        %v214 = vrot.slane %v209, %v213
        %vm216 = vcmask 293888
        %v218 = vsel %vm216, %v200, 0
        %v221 = vsel %vm216, %v201, 0
        %v224 = vsel %vm216, %v202, 0
        %v227 = vsel %vm216, %v203, 0
        %vm229 = vcmask 1043456
        %v231 = vsel %vm229, %v208, 0
        %233 = vmatprep.subr.mxu0 0.0
        %234 = vmatpush1.msra.mxu0 %v204
        %235 = vmatprep.subr.mxu0 0.0
        %236 = vmatpush1.msra.mxu0 %v205
        %237 = vmatprep.subr.mxu0 0.0
        %238 = vmatpush1.msra.mxu0 %v206
        %239 = vmatprep.subr.mxu0 0.0
        %240 = vmatpush1.msra.mxu0 %v207
        %241 = vmatprep.subr.mxu0 0.0
        %242 = vmatpush1.msra.mxu0 %v231
        %243 = vmatprep.subr.mxu0 0.0
        %244 = vmatpush1.msra.mxu0 0.0
        %245 = vmatprep.subr.mxu0 0.0
        %246 = vmatpush1.msra.mxu0 0.0
        %247 = vmatprep.subr.mxu0 0.0
        %248 = vmatpush1.msra.mxu0 0.0
        %249 = vmatprep.subr.mxu0 0.0
        %250 = vmatpush1.msra.mxu0 0.0
        %251 = vmatprep.subr.mxu0 0.0
        %252 = vmatpush1.msra.mxu0 0.0
        %253 = vmatprep.subr.mxu0 0.0
        %254 = vmatpush1.msra.mxu0 0.0
        %255 = vmatprep.subr.mxu0 0.0
        %256 = vmatpush1.msra.mxu0 0.0
        %257 = vmatprep.subr.mxu0 0.0
        %258 = vmatpush1.msra.mxu0 0.0
        %259 = vmatprep.subr.mxu0 0.0
        %260 = vmatpush1.msra.mxu0 0.0
        %261 = vmatprep.subr.mxu0 0.0
        %262 = vmatpush1.msra.mxu0 0.0
        %263 = vmatprep.subr.mxu0 0.0
        %264 = vmatpush1.msra.mxu0 0.0
        %265 = vmatprep.subr.mxu0 0.0
        %266 = vmatpush1.msra.mxu0 0.0
        %267 = vmatprep.subr.mxu0 0.0
        %268 = vmatpush1.msra.mxu0 0.0
        %269 = vmatprep.subr.mxu0 0.0
        %270 = vmatpush1.msra.mxu0 0.0
        %271 = vmatprep.subr.mxu0 0.0
        %272 = vmatpush1.msra.mxu0 0.0
        %273 = vmatprep.subr.mxu0 0.0
        %274 = vmatpush1.msra.mxu0 0.0
        %275 = vmatprep.subr.mxu0 0.0
        %276 = vmatpush1.msra.mxu0 0.0
        %277 = vmatprep.subr.mxu0 0.0
        %278 = vmatpush1.msra.mxu0 0.0
        %279 = vmatprep.subr.mxu0 0.0
        %280 = vmatpush1.msra.mxu0 0.0
        %281 = vmatprep.subr.mxu0 0.0
        %282 = vmatpush1.msra.mxu0 0.0
        %283 = vmatprep.subr.mxu0 0.0
        %284 = vmatpush1.msra.mxu0 0.0
        %285 = vmatprep.subr.mxu0 0.0
        %286 = vmatpush1.msra.mxu0 0.0
        %287 = vmatprep.subr.mxu0 0.0
        %288 = vmatpush1.msra.mxu0 0.0
        %289 = vmatprep.subr.mxu0 0.0
        %290 = vmatpush1.msra.mxu0 0.0
        %291 = vmatprep.subr.mxu0 0.0
        %292 = vmatpush1.msra.mxu0 0.0
        %293 = vmatprep.subr.mxu0 0.0
        %294 = vmatpush1.msra.mxu0 0.0
        %295 = vmatprep.subr.mxu0 0.0
        %296 = vmatpush1.msra.mxu0 0.0
        %297 = vmatprep.mubr.f32.mxu0 0.0
        %298 = vmatmul.mubr.f32.gmra.mrb[0].mxu0 %v218
        %v299 = vpop.f32.mrb[0].mxu0
        %v300 = vadd.f32 %v214, %v299
        %v301 = vpop.f32.mrb[0].mxu0
        %302 = vmatprep.mubr.f32.mxu0 0.0
        %303 = vmatmul.mubr.f32.gmra.mrb[0].mxu0 %v221
        %v304 = vpop.f32.mrb[0].mxu0
        %v305 = vadd.f32 %v214, %v304
        %v306 = vpop.f32.mrb[0].mxu0
        %307 = vmatprep.mubr.f32.mxu0 0.0
        %308 = vmatmul.mubr.f32.gmra.mrb[0].mxu0 %v224
        %v309 = vpop.f32.mrb[0].mxu0
        %v310 = vadd.f32 %v214, %v309
        %v311 = vpop.f32.mrb[0].mxu0
        %312 = vmatprep.mubr.f32.mxu0 0.0
        %313 = vmatmul.mubr.f32.gmra.mrb[0].mxu0 %v227
        %v314 = vpop.f32.mrb[0].mxu0
        %v315 = vadd.f32 %v214, %v314
        %v316 = vpop.f32.mrb[0].mxu0
        %317 = vdwg.mxu0
        %v318 = vmax.f32 %v300, 0.0
        %v319 = vmax.f32 %v305, 0.0
        %v320 = vmax.f32 %v310, 0.0
        %v321 = vmax.f32 %v315, 0.0
        %322 = vst [vmem:[%s188] sm:$0xff] %v318
        %323 = vst [vmem:[%s188 + $0x8] sm:$0xff] %v319
        %324 = vst [vmem:[%s188 + $0x10] sm:$0xff] %v320
        %325 = vst [vmem:[%s188 + $0x18] sm:$0xff] %v321
        %s326 = sand.u32 %s109, 1
        %s327 = scalar_lea.sflag [#allocation3], %s326
        %s328 = sand.u32 %s109, 1
        %s329 = smul.addr %s328, 32
        %s330 = scalar_lea.vmem [#allocation2], %s329
        // Predicated region
        $region33: #{tpu_custom_call.1} parent=31 // pred_check
          %p331 = pneg %p119
        $region34: #{tpu_custom_call.1} parent=31 // pred_check_branch
          %333 = sbr.rel (%p331) target = $region36
        $region35: #{tpu_custom_call.1} parent=31 // pred_region
          %s334 = smul.u32 4, %s22
          %s336 = ssub.s32 512, 512
          %337 = vsyncadd %s327, %s336
          %s338 = smul.addr %s21, 8
          %s339 = sadd.s32 %s334, %s338
          %s340 = smul.addr %s339, 128
          %s341 = scalar_lea.hbm %s3, %s340
          %s342 = sshll.u32 %s330, 4
          %s343 = int_to_ptr.vmem [resolvable:$true] %s342
          %348 = dma.vmem_to_hbm [thread:$0]  %s343, 512, %s341, %s327, 128, 128, 8
        $region36: #{tpu_custom_call.1} parent=31 // pred_fallthru
          _
      $region32: #{tpu_custom_call.1} parent=5 // pred_fallthru
        _
      %p349 = scmp.le.s32.totalorder 2, %s12
      // Predicated region
      $region37: #{tpu_custom_call.1} parent=5 // pred_check
        %p350 = pneg %p349
      $region38: #{tpu_custom_call.1} parent=5 // pred_check_branch
        %352 = sbr.rel (%p350) target = $region40
      $region39: #{tpu_custom_call.1} parent=5 // pred_region
        %s353 = ssub.s32 %s12, 2
        // Predicated region
        $region41: #{tpu_custom_call.1} parent=39 // pred_check
          %p354 = pneg %p125
        $region42: #{tpu_custom_call.1} parent=39 // pred_check_branch
          %356 = sbr.rel (%p354) target = $region44
        $region43: #{tpu_custom_call.1} parent=39 // pred_region
          %s357 = sand.u32 %s110, 1
          %s358 = scalar_lea.sflag [#allocation3], %s357
          %s359 = sand.u32 %s110, 1
          %s360 = smul.addr %s359, 32
          %s361 = scalar_lea.vmem [#allocation2], %s360
          %362 = dma.done %s358, 512
        $region44: #{tpu_custom_call.1} parent=39 // pred_fallthru
          _
      $region40: #{tpu_custom_call.1} parent=5 // pred_fallthru
        _
    $region6: #{tpu_custom_call.1} parent=1 // loop_footer
      %s16 = sadd.s32 1, %s12
    $region7: #{tpu_custom_call.1} parent=1 // loop_footer_branch
      %11 = sbr.rel target = $region3
    $region8: #{tpu_custom_call.1} parent=1 // loop_exit
      _
    %363 = vsyncpa [#allocation3], 1
    %s364 = scalar_lea.sflag [#allocation3], 1
    %365 = vsyncpa %s364, 1

</llo_original>
